<compile_context>
chip_gen: v7x
topology: tpu7x:2x2x1
jax: 0.10.0
libtpu: 0.0.40
codegen_flags: <defaults>
</compile_context>

<pallas_src>
import functools
import math

import jax
import jax.numpy as jnp
from jax.experimental import pallas as pl
from jax.experimental.pallas import tpu as pltpu


# ---------------------------------------------------------------------------
# Fused Pallas kernel
# ---------------------------------------------------------------------------

def _pointcn_kernel(*refs, eps, n_true, has_shortcut, matmul_dtype):
    """Fused PointCN forward for one batch element.

    Refs:
      x:  (Cin, Np)  f32     input tile (padded columns are zero)
      w1: (Cout, Cin)        BN-scale-folded first conv weight (matmul_dtype)
      w2: (Cout, Cout)       BN-scale-folded second conv weight (matmul_dtype)
      [ws: (Cout, Cin)]      optional shot_cut conv weight (matmul_dtype)
      pk: (Cmax, 3)  f32     packed per-channel params:
                               col 0 = t1/s1 (Cin rows), col 1 = t2/s2,
                               col 2 = output bias (b2 [+ bs])
      o:  (Cout, Np) f32
    """
    if has_shortcut:
        x_ref, w1_ref, w2_ref, ws_ref, pk_ref, o_ref = refs
    else:
        x_ref, w1_ref, w2_ref, pk_ref, o_ref = refs

    x = x_ref[...]                                  # (Cin, Np) f32
    cin = x.shape[0]
    n_pad = x.shape[-1]
    cout = o_ref.shape[0]
    n_inv = 1.0 / n_true

    pk = pk_ref[...]                                # (Cmax, 3)
    t1 = pk[:cin, 0:1]
    t2 = pk[:cout, 1:2]
    bias = pk[:cout, 2:3]

    def inorm_shift_relu(h, t):
        # InstanceNorm1d(eps): one-pass moments over the true N (padded columns
        # of h are zero, so the sums are exact after dividing by n_true).
        mu = jnp.sum(h, axis=-1, keepdims=True) * n_inv
        m2 = jnp.sum(h * h, axis=-1, keepdims=True) * n_inv
        var = jnp.maximum(m2 - mu * mu, 0.0)        # one-pass var can dip < 0
        hn = (h - mu) * jax.lax.rsqrt(var + eps)    # rsqrt -> EUP
        # BN scale already folded into the next conv's weight columns.
        return jnp.maximum(hn + t, 0.0)

    h = inorm_shift_relu(x, t1)                     # (Cin, Np)
    if n_pad != n_true:
        lane = jax.lax.broadcasted_iota(jnp.int32, (1, n_pad), 1)
        # Keep padded columns zero so the 2nd norm's statistics stay exact
        # (conv1 has no bias: W @ 0 == 0 in the padded columns).
        h = jnp.where(lane < n_true, h, 0.0)

    h = jnp.dot(w1_ref[...], h.astype(matmul_dtype),
                preferred_element_type=jnp.float32)  # (Cout, Np); b1 cancelled
    h = inorm_shift_relu(h, t2)                     # (Cout, Np)
    out = jnp.dot(w2_ref[...], h.astype(matmul_dtype),
                  preferred_element_type=jnp.float32)
    if has_shortcut:
        out = out + jnp.dot(ws_ref[...], x.astype(matmul_dtype),
                            preferred_element_type=jnp.float32)
    else:
        out = out + x
    o_ref[...] = out + bias


# ---------------------------------------------------------------------------
# Wrapper
# ---------------------------------------------------------------------------

def point_cn(x, params, eps=1e-3, matmul_dtype=jnp.bfloat16):
    """PointCN forward: x (B, Cin, N) -> (B, Cout, N) in a single pallas_call.

    Requires the (eval-mode) BN scale s1/s2 > 0 so it can be folded into the
    conv weights.
    """
    B, Cin, N = x.shape
    Cout = params["w1"].shape[0]
    has_shortcut = "ws" in params
    Cmax = max(Cin, Cout)

    # Fold eval-mode BN (scale s > 0, shift t) into the conv weights / shifts.
    s1, t1 = params["s1"], params["t1"]
    s2, t2 = params["s2"], params["t2"]
    w1f = (params["w1"] * s1[None, :]).astype(matmul_dtype)
    w2f = (params["w2"] * s2[None, :]).astype(matmul_dtype)
    bias = params["b2"]                 # b1 is cancelled by the 2nd InstanceNorm
    if has_shortcut:
        wsf = params["ws"].astype(matmul_dtype)
        bias = bias + params["bs"]

    # Pack the remaining per-channel vectors into one (Cmax, 3) tile.
    def pad_c(v):
        return jnp.pad(v, (0, Cmax - v.shape[0]))
    packed = jnp.stack([pad_c(t1 / s1), pad_c(t2 / s2), pad_c(bias)],
                       axis=1).astype(jnp.float32)          # (Cmax, 3)

    # Pad N up to a multiple of 128 -> lane-dense tiles, unmasked stores.
    Np = 128 * pl.cdiv(N, 128)
    x_in = jnp.pad(x, ((0, 0), (0, 0), (0, Np - N))) if Np != N else x

    args = [x_in, w1f, w2f]
    in_specs = [
        pl.BlockSpec((None, Cin, Np), lambda i: (i, 0, 0)),
        pl.BlockSpec((Cout, Cin), lambda i: (0, 0)),
        pl.BlockSpec((Cout, Cout), lambda i: (0, 0)),
    ]
    if has_shortcut:
        args.append(wsf)
        in_specs.append(pl.BlockSpec((Cout, Cin), lambda i: (0, 0)))
    args.append(packed)
    in_specs.append(pl.BlockSpec((Cmax, 3), lambda i: (0, 0)))

    # Explicit scoped-VMEM budget (defaults: 16 MiB v5e, 32 MiB v6e/v7x; v7x has
    # only 64 MiB physical).  Per-step tiles are double-buffered -> headroom.
    itemsize = jnp.dtype(matmul_dtype).itemsize
    act_bytes = 4 * Np * (Cin + Cout)
    w_bytes = itemsize * (Cout * Cin + Cout * Cout
                          + (Cout * Cin if has_shortcut else 0))
    est = 2 * (act_bytes + w_bytes + 4 * Cmax * 128)
    vmem_limit = int(min(64 * 2**20, max(16 * 2**20, 4 * est)))

    out = pl.pallas_call(
        functools.partial(_pointcn_kernel, eps=eps, n_true=N,
                          has_shortcut=has_shortcut, matmul_dtype=matmul_dtype),
        out_shape=jax.ShapeDtypeStruct((B, Cout, Np), jnp.float32),
        grid=(B,),
        in_specs=in_specs,
        out_specs=pl.BlockSpec((None, Cout, Np), lambda i: (i, 0, 0)),
        compiler_params=pltpu.CompilerParams(
            dimension_semantics=("parallel",),
            vmem_limit_bytes=vmem_limit),
    )(*args)
    return out[:, :, :N] if Np != N else out


# ---------------------------------------------------------------------------
# Pure-JAX reference (original, unfolded math; validates the algebra)
# ---------------------------------------------------------------------------

def point_cn_ref(x, params, eps=1e-3):
    def inorm(h):
        mu = jnp.mean(h, axis=-1, keepdims=True)
        var = jnp.mean(jnp.square(h - mu), axis=-1, keepdims=True)
        return (h - mu) / jnp.sqrt(var + eps)

    def bn_relu(h, s, t):
        return jnp.maximum(h * s[None, :, None] + t[None, :, None], 0.0)

    hp = jax.lax.Precision.HIGHEST
    h = bn_relu(inorm(x), params["s1"], params["t1"])
    h = jnp.einsum("oc,bcn->bon", params["w1"], h,
                   precision=hp) + params["b1"][None, :, None]
    h = bn_relu(inorm(h), params["s2"], params["t2"])
    h = jnp.einsum("oc,bcn->bon", params["w2"], h,
                   precision=hp) + params["b2"][None, :, None]
    if "ws" in params:
        sc = jnp.einsum("oc,bcn->bon", params["ws"], x,
                        precision=hp) + params["bs"][None, :, None]
        return h + sc
    return h + x


# ---------------------------------------------------------------------------
# Deterministic parameter initialization (PyTorch-style conv bounds; BN with
# non-trivial "trained" running stats so the weight folding is exercised)
# ---------------------------------------------------------------------------

def init_conv(key, c_out, c_in):
    kw, kb = jax.random.split(key)
    bound = 1.0 / math.sqrt(c_in)
    w = jax.random.uniform(kw, (c_out, c_in), jnp.float32, -bound, bound)
    b = jax.random.uniform(kb, (c_out,), jnp.float32, -bound, bound)
    return w, b


def bn_affine(key, c, eps=1e-5):
    # Eval-mode SyncBatchNorm folded to scale/shift: s = gamma/sqrt(rv+eps) > 0,
    # t = beta - rm*s.  (Training-mode batch stats are not modeled.)
    kg, kb, km, kv = jax.random.split(key, 4)
    gamma = jax.random.uniform(kg, (c,), jnp.float32, 0.5, 1.5)
    beta = jax.random.uniform(kb, (c,), jnp.float32, -0.5, 0.5)
    rmean = 0.1 * jax.random.normal(km, (c,), jnp.float32)
    rvar = jax.random.uniform(kv, (c,), jnp.float32, 0.5, 1.5)
    s = gamma / jnp.sqrt(rvar + eps)
    t = beta - rmean * s
    return s, t


def init_pointcn(key, c_in, c_out):
    k1, k2, k3, k4, k5 = jax.random.split(key, 5)
    w1, b1 = init_conv(k1, c_out, c_in)
    w2, b2 = init_conv(k2, c_out, c_out)
    s1, t1 = bn_affine(k4, c_in)
    s2, t2 = bn_affine(k5, c_out)
    p = dict(w1=w1, b1=b1, w2=w2, b2=b2, s1=s1, t1=t1, s2=s2, t2=t2)
    if c_out != c_in:
        ws, bs = init_conv(k3, c_out, c_in)     # shot_cut Conv1d
        p.update(ws=ws, bs=bs)
    return p


# ---------------------------------------------------------------------------
# Main
# ---------------------------------------------------------------------------

if __name__ == "__main__":
    # TODO(synk): SyncBatchNorm cross-device batch statistics (training mode)
    # have no in-kernel equivalent; it is evaluated in inference mode with its
    # running stats folded into a per-channel affine scale/shift.
    B, C, N = 2, 32, 256

    key = jax.random.PRNGKey(0)
    kx, kp1, kp2 = jax.random.split(key, 3)
    x = jax.random.normal(kx, (B, C, N), jnp.float32)

    params_same = init_pointcn(kp1, C, C)        # out_channels == channels
    params_proj = init_pointcn(kp2, C, 2 * C)    # out_channels != channels -> shot_cut

    fwd_f32 = jax.jit(functools.partial(point_cn, matmul_dtype=jnp.float32))
    fwd_bf16 = jax.jit(functools.partial(point_cn, matmul_dtype=jnp.bfloat16))

    r_same = point_cn_ref(x, params_same)
    r_proj = point_cn_ref(x, params_proj)

    # f32-MXU path: tight validation of the algebraic folds (dropped b1, BN
    # scale folded into weights, merged output bias, packed params).
    y_same = fwd_f32(x, params_same)
    y_proj = fwd_f32(x, params_proj)
    jax.block_until_ready((y_same, y_proj))
    assert y_same.shape == (B, C, N)
    assert y_proj.shape == (B, 2 * C, N)
    err_same = float(jnp.max(jnp.abs(y_same - r_same)))
    err_proj = float(jnp.max(jnp.abs(y_proj - r_proj)))
    assert err_same < 2e-3, err_same
    assert err_proj < 2e-3, err_proj

    # bf16-MXU operands (default path for v6e/v7x), f32 accumulation: looser
    # tolerance against the f32 reference.
    yb_same = fwd_bf16(x, params_same)
    yb_proj = fwd_bf16(x, params_proj)
    jax.block_until_ready((yb_same, yb_proj))
    assert bool(jnp.all(jnp.isfinite(yb_same)))
    assert bool(jnp.all(jnp.isfinite(yb_proj)))
    errb_same = float(jnp.max(jnp.abs(yb_same - r_same)))
    errb_proj = float(jnp.max(jnp.abs(yb_proj - r_proj)))
    assert errb_same < 1e-1, errb_same
    assert errb_proj < 1e-1, errb_proj

    # Non-128-multiple N exercises the pad-to-128 + true-N-stats masking path.
    N2 = 200
    x2 = x[:, :, :N2]
    y2 = fwd_f32(x2, params_proj)
    jax.block_until_ready(y2)
    r2 = point_cn_ref(x2, params_proj)
    assert y2.shape == (B, 2 * C, N2)
    err2 = float(jnp.max(jnp.abs(y2 - r2)))
    assert err2 < 2e-3, err2

    print("KERNEL_OK")
</pallas_src>

<mosaic_0001>
module attributes {stable_mosaic.version = 11 : i64} {
  func.func @_pointcn_kernel(%arg0: i32, %arg1: memref<1x32x256xf32, #tpu.memory_space<vmem>>, %arg2: memref<32x32xf32, #tpu.memory_space<vmem>>, %arg3: memref<32x32xf32, #tpu.memory_space<vmem>>, %arg4: memref<32x3xf32, #tpu.memory_space<vmem>>, %arg5: memref<1x32x256xf32, #tpu.memory_space<vmem>>) attributes {dimension_semantics = [#tpu.dimension_semantics<parallel>], iteration_bounds = array<i64: 2>, scalar_prefetch = 0 : i64, scratch_operands = 0 : i64, tpu.core_type = #tpu.core_type<tc>, window_params = [{transform_indices = @transform_0, window_bounds = array<i64: 1, 32, 256>}, {pipeline_mode = #tpu.pipeline_mode<synchronous>, transform_indices = @transform_1, window_bounds = array<i64: 32, 32>}, {pipeline_mode = #tpu.pipeline_mode<synchronous>, transform_indices = @transform_2, window_bounds = array<i64: 32, 32>}, {pipeline_mode = #tpu.pipeline_mode<synchronous>, transform_indices = @transform_3, window_bounds = array<i64: 32, 3>}, {transform_indices = @transform_4, window_bounds = array<i64: 1, 32, 256>}]} {
    %c0 = arith.constant 0 : index
    %c0_0 = arith.constant 0 : index
    %c0_1 = arith.constant 0 : index
    %0 = vector.load %arg1[%c0, %c0_0, %c0_1] : memref<1x32x256xf32, #tpu.memory_space<vmem>>, vector<1x32x256xf32>
    %1 = vector.shape_cast %0 : vector<1x32x256xf32> to vector<32x256xf32>
    %c0_2 = arith.constant 0 : index
    %c0_3 = arith.constant 0 : index
    %2 = vector.load %arg4[%c0_2, %c0_3] : memref<32x3xf32, #tpu.memory_space<vmem>>, vector<32x3xf32>
    %3 = vector.extract_strided_slice %2 {offsets = [0, 0], sizes = [32, 1], strides = [1, 1]} : vector<32x3xf32> to vector<32x1xf32>
    %4 = vector.extract_strided_slice %2 {offsets = [0, 1], sizes = [32, 1], strides = [1, 1]} : vector<32x3xf32> to vector<32x1xf32>
    %5 = vector.extract_strided_slice %2 {offsets = [0, 2], sizes = [32, 1], strides = [1, 1]} : vector<32x3xf32> to vector<32x1xf32>
    %cst = arith.constant dense<0.000000e+00> : vector<32xf32>
    %6 = vector.multi_reduction <add>, %1, %cst [1] : vector<32x256xf32> to vector<32xf32>
    %7 = vector.shape_cast %6 : vector<32xf32> to vector<32x1xf32>
    %cst_4 = arith.constant 3.906250e-03 : f32
    %8 = vector.broadcast %cst_4 : f32 to vector<32x1xf32>
    %9 = arith.mulf %7, %8 : vector<32x1xf32>
    %10 = arith.mulf %1, %1 : vector<32x256xf32>
    %cst_5 = arith.constant dense<0.000000e+00> : vector<32xf32>
    %11 = vector.multi_reduction <add>, %10, %cst_5 [1] : vector<32x256xf32> to vector<32xf32>
    %12 = vector.shape_cast %11 : vector<32xf32> to vector<32x1xf32>
    %cst_6 = arith.constant 3.906250e-03 : f32
    %13 = vector.broadcast %cst_6 : f32 to vector<32x1xf32>
    %14 = arith.mulf %12, %13 : vector<32x1xf32>
    %15 = arith.mulf %9, %9 : vector<32x1xf32>
    %16 = arith.subf %14, %15 : vector<32x1xf32>
    %cst_7 = arith.constant 0.000000e+00 : f32
    %17 = vector.broadcast %cst_7 : f32 to vector<32x1xf32>
    %18 = arith.maximumf %16, %17 : vector<32x1xf32>
    %19 = vector.broadcast %9 : vector<32x1xf32> to vector<32x256xf32>
    %20 = arith.subf %1, %19 : vector<32x256xf32>
    %cst_8 = arith.constant 1.000000e-03 : f32
    %21 = vector.broadcast %cst_8 : f32 to vector<32x1xf32>
    %22 = arith.addf %18, %21 : vector<32x1xf32>
    %23 = math.rsqrt %22 : vector<32x1xf32>
    %24 = vector.broadcast %23 : vector<32x1xf32> to vector<32x256xf32>
    %25 = arith.mulf %20, %24 : vector<32x256xf32>
    %26 = vector.broadcast %3 : vector<32x1xf32> to vector<32x256xf32>
    %27 = arith.addf %25, %26 : vector<32x256xf32>
    %cst_9 = arith.constant 0.000000e+00 : f32
    %28 = vector.broadcast %cst_9 : f32 to vector<32x256xf32>
    %29 = arith.maximumf %27, %28 : vector<32x256xf32>
    %c0_10 = arith.constant 0 : index
    %c0_11 = arith.constant 0 : index
    %30 = vector.load %arg2[%c0_10, %c0_11] : memref<32x32xf32, #tpu.memory_space<vmem>>, vector<32x32xf32>
    %cst_12 = arith.constant dense<0.000000e+00> : vector<32x256xf32>
    %31 = tpu.matmul %30, %29, %cst_12 {dimension_numbers = #tpu.dot_dimension_numbers<[1], [0], [0], [1], [0, 0, 1, 1], [], []>} : vector<32x32xf32>, vector<32x256xf32>, vector<32x256xf32> -> vector<32x256xf32>
    %cst_13 = arith.constant dense<0.000000e+00> : vector<32xf32>
    %32 = vector.multi_reduction <add>, %31, %cst_13 [1] : vector<32x256xf32> to vector<32xf32>
    %33 = vector.shape_cast %32 : vector<32xf32> to vector<32x1xf32>
    %cst_14 = arith.constant 3.906250e-03 : f32
    %34 = vector.broadcast %cst_14 : f32 to vector<32x1xf32>
    %35 = arith.mulf %33, %34 : vector<32x1xf32>
    %36 = arith.mulf %31, %31 : vector<32x256xf32>
    %cst_15 = arith.constant dense<0.000000e+00> : vector<32xf32>
    %37 = vector.multi_reduction <add>, %36, %cst_15 [1] : vector<32x256xf32> to vector<32xf32>
    %38 = vector.shape_cast %37 : vector<32xf32> to vector<32x1xf32>
    %cst_16 = arith.constant 3.906250e-03 : f32
    %39 = vector.broadcast %cst_16 : f32 to vector<32x1xf32>
    %40 = arith.mulf %38, %39 : vector<32x1xf32>
    %41 = arith.mulf %35, %35 : vector<32x1xf32>
    %42 = arith.subf %40, %41 : vector<32x1xf32>
    %cst_17 = arith.constant 0.000000e+00 : f32
    %43 = vector.broadcast %cst_17 : f32 to vector<32x1xf32>
    %44 = arith.maximumf %42, %43 : vector<32x1xf32>
    %45 = vector.broadcast %35 : vector<32x1xf32> to vector<32x256xf32>
    %46 = arith.subf %31, %45 : vector<32x256xf32>
    %cst_18 = arith.constant 1.000000e-03 : f32
    %47 = vector.broadcast %cst_18 : f32 to vector<32x1xf32>
    %48 = arith.addf %44, %47 : vector<32x1xf32>
    %49 = math.rsqrt %48 : vector<32x1xf32>
    %50 = vector.broadcast %49 : vector<32x1xf32> to vector<32x256xf32>
    %51 = arith.mulf %46, %50 : vector<32x256xf32>
    %52 = vector.broadcast %4 : vector<32x1xf32> to vector<32x256xf32>
    %53 = arith.addf %51, %52 : vector<32x256xf32>
    %cst_19 = arith.constant 0.000000e+00 : f32
    %54 = vector.broadcast %cst_19 : f32 to vector<32x256xf32>
    %55 = arith.maximumf %53, %54 : vector<32x256xf32>
    %c0_20 = arith.constant 0 : index
    %c0_21 = arith.constant 0 : index
    %56 = vector.load %arg3[%c0_20, %c0_21] : memref<32x32xf32, #tpu.memory_space<vmem>>, vector<32x32xf32>
    %cst_22 = arith.constant dense<0.000000e+00> : vector<32x256xf32>
    %57 = tpu.matmul %56, %55, %cst_22 {dimension_numbers = #tpu.dot_dimension_numbers<[1], [0], [0], [1], [0, 0, 1, 1], [], []>} : vector<32x32xf32>, vector<32x256xf32>, vector<32x256xf32> -> vector<32x256xf32>
    %58 = arith.addf %57, %1 : vector<32x256xf32>
    %59 = vector.broadcast %5 : vector<32x1xf32> to vector<32x256xf32>
    %60 = arith.addf %58, %59 : vector<32x256xf32>
    %c0_23 = arith.constant 0 : index
    %c0_24 = arith.constant 0 : index
    %c0_25 = arith.constant 0 : index
    %61 = vector.load %arg5[%c0_23, %c0_24, %c0_25] : memref<1x32x256xf32, #tpu.memory_space<vmem>>, vector<1x32x256xf32>
    %62 = vector.shape_cast %61 : vector<1x32x256xf32> to vector<32x256xf32>
    %63 = vector.shape_cast %60 : vector<32x256xf32> to vector<1x32x256xf32>
    tpu.vector_store %arg5[%c0_23, %c0_24, %c0_25], %63 {strides = array<i32>} : memref<1x32x256xf32, #tpu.memory_space<vmem>>, vector<1x32x256xf32>,
    return
  }
  func.func @transform_0(%arg0: i32) -> (i32, i32, i32) {
    %c0_i32 = arith.constant 0 : i32
    %c0_i32_0 = arith.constant 0 : i32
    %c0_i32_1 = arith.constant 0 : i32
    return %arg0, %c0_i32, %c0_i32_0 : i32, i32, i32
  }
  func.func @transform_1(%arg0: i32) -> (i32, i32) {
    %c0_i32 = arith.constant 0 : i32
    %c0_i32_0 = arith.constant 0 : i32
    %c0_i32_1 = arith.constant 0 : i32
    return %c0_i32, %c0_i32_0 : i32, i32
  }
  func.func @transform_2(%arg0: i32) -> (i32, i32) {
    %c0_i32 = arith.constant 0 : i32
    %c0_i32_0 = arith.constant 0 : i32
    %c0_i32_1 = arith.constant 0 : i32
    return %c0_i32, %c0_i32_0 : i32, i32
  }
  func.func @transform_3(%arg0: i32) -> (i32, i32) {
    %c0_i32 = arith.constant 0 : i32
    %c0_i32_0 = arith.constant 0 : i32
    %c0_i32_1 = arith.constant 0 : i32
    return %c0_i32, %c0_i32_0 : i32, i32
  }
  func.func @transform_4(%arg0: i32) -> (i32, i32, i32) {
    %c0_i32 = arith.constant 0 : i32
    %c0_i32_0 = arith.constant 0 : i32
    %c0_i32_1 = arith.constant 0 : i32
    return %arg0, %c0_i32, %c0_i32_0 : i32, i32, i32
  }
}

</mosaic_0001>

<llo_original>
// kernel: point_cn.1
$region0: #{point_cn.1}
  #allocation0 [shape = 'u32[]', space=smem, size = 0x4, offset = 0x4, fixed_abs, tag = 'smem constant byte address 0x4 - core index']
  #allocation1 [shape = 'u32[144,128]{1,0:T(1,128)}', space=vmem, size = 0x12000, scoped, tag = 'internal scratch']
  %s0 = inlined_call_operand.vmem [shape: f32[2,32,256], index: 0, kind: input, shape index: {}]
  %s1 = inlined_call_operand.vmem [shape: f32[32,32], index: 1, kind: input, shape index: {}]
  %s2 = inlined_call_operand.vmem [shape: f32[32,32], index: 2, kind: input, shape index: {}]
  %s3 = inlined_call_operand.vmem [shape: f32[32,3], index: 3, kind: input, shape index: {}]
  %s4 = inlined_call_operand.hbm [shape: f32[2,32,256], index: 4, kind: output, shape index: {}]
  %s5 = sld [smem:[#allocation0]]
  $region49: #{point_cn.1} parent=0
    _
  %s7 = ssub.s32 1, %s5
  %s8 = scalar_select 0, %s7, %s5
  $region1: #{point_cn.1} parent=0
    #allocation2 [shape = 'u8[65536]{0}', space=vmem, size = 0x10000, scoped, tag = 'output window, operand 0']
    #allocation3 [shape = 's32[2]{0}', space=sflag, size = 0x8, scoped, tag = 'scoped memory for point_cn.1']
    %9 = vsyncpa [#allocation3], 0
    %s10 = scalar_lea.sflag [#allocation3], 1
    %11 = vsyncpa %s10, 0
    loop: start=0, step=1, limit=4
    $region2: #{point_cn.1} parent=1 // loop_pre_header
      _
    $region3: #{point_cn.1} parent=1 // loop_header
      %s13 = sphi 0, %s17
      %p14 = scmp.ge.s32.totalorder %s13, 4
      %s23 = sphi 0, %s25
      %s26 = sphi 0, %s23
      %s27 = sphi 0, %s26
      %s43 = sphi 0, %s27
      %s47 = sphi 0, %s47
      %s49 = sphi 0, %s47
      %s50 = sphi 0, %s49
      %s64 = sphi 0, %s50
      %s68 = sphi 0, %s68
      %s70 = sphi 0, %s68
      %s71 = sphi 0, %s70
      %s85 = sphi 0, %s71
      %s89 = sphi 0, %s89
      %s91 = sphi 0, %s89
      %s92 = sphi 0, %s91
      %s106 = sphi 0, %s92
      %s112 = sphi 0, %s114
      %s115 = sphi 0, %s112
      %s116 = sphi 0, %s115
      %s132 = sphi 0, %s116
    $region4: #{point_cn.1} parent=1 // loop_header_branch
      %16 = sbr.rel (%p14) target = $region8
    $region5: #{point_cn.1} parent=1 // loop_body
      %s18 = ssub.s32 %s13, 1
      %s19 = ssub.s32 %s13, 2
      %s20 = sadd.s32 %s13, 1
      %s21 = ssub.s32 %s13, %s20
      %p22 = scmp.eq.s32.totalorder %s21, 0
      %s24 = sadd.s32 %s23, 1
      %s25 = scalar_select %p22, %s23, %s24
      %p28 = pneg %p22
      %p29 = scmp.eq.s32.totalorder %s13, 1
      %p30 = por %p28, %p29
      %p31 = scmp.ne.s32.totalorder %s23, %s26
      %p32 = scmp.eq.s32.totalorder %s13, 0
      %p33 = por %p31, %p32
      %p34 = scmp.ne.s32.totalorder %s23, %s26
      %p35 = scmp.eq.s32.totalorder %s18, 1
      %p36 = por %p34, %p35
      %p37 = scmp.ne.s32.totalorder %s26, %s27
      %p38 = scmp.eq.s32.totalorder %s18, 0
      %p39 = por %p37, %p38
      %p40 = scmp.ne.s32.totalorder %s26, %s27
      %p41 = scmp.eq.s32.totalorder %s19, 1
      %p42 = por %p40, %p41
      %p44 = scmp.ne.s32.totalorder %s27, %s43
      %p45 = scmp.eq.s32.totalorder %s19, 0
      %p46 = por %p44, %p45
      %s48 = sadd.s32 %s47, 1
      %p51 = scmp.eq.s32.totalorder %s13, 1
      %p52 = scmp.ne.s32.totalorder %s47, %s49
      %p53 = scmp.eq.s32.totalorder %s13, 0
      %p54 = por %p52, %p53
      %p55 = scmp.ne.s32.totalorder %s47, %s49
      %p56 = scmp.eq.s32.totalorder %s18, 1
      %p57 = por %p55, %p56
      %p58 = scmp.ne.s32.totalorder %s49, %s50
      %p59 = scmp.eq.s32.totalorder %s18, 0
      %p60 = por %p58, %p59
      %p61 = scmp.ne.s32.totalorder %s49, %s50
      %p62 = scmp.eq.s32.totalorder %s19, 1
      %p63 = por %p61, %p62
      %p65 = scmp.ne.s32.totalorder %s50, %s64
      %p66 = scmp.eq.s32.totalorder %s19, 0
      %p67 = por %p65, %p66
      %s69 = sadd.s32 %s68, 1
      %p72 = scmp.eq.s32.totalorder %s13, 1
      %p73 = scmp.ne.s32.totalorder %s68, %s70
      %p74 = scmp.eq.s32.totalorder %s13, 0
      %p75 = por %p73, %p74
      %p76 = scmp.ne.s32.totalorder %s68, %s70
      %p77 = scmp.eq.s32.totalorder %s18, 1
      %p78 = por %p76, %p77
      %p79 = scmp.ne.s32.totalorder %s70, %s71
      %p80 = scmp.eq.s32.totalorder %s18, 0
      %p81 = por %p79, %p80
      %p82 = scmp.ne.s32.totalorder %s70, %s71
      %p83 = scmp.eq.s32.totalorder %s19, 1
      %p84 = por %p82, %p83
      %p86 = scmp.ne.s32.totalorder %s71, %s85
      %p87 = scmp.eq.s32.totalorder %s19, 0
      %p88 = por %p86, %p87
      %s90 = sadd.s32 %s89, 1
      %p93 = scmp.eq.s32.totalorder %s13, 1
      %p94 = scmp.ne.s32.totalorder %s89, %s91
      %p95 = scmp.eq.s32.totalorder %s13, 0
      %p96 = por %p94, %p95
      %p97 = scmp.ne.s32.totalorder %s89, %s91
      %p98 = scmp.eq.s32.totalorder %s18, 1
      %p99 = por %p97, %p98
      %p100 = scmp.ne.s32.totalorder %s91, %s92
      %p101 = scmp.eq.s32.totalorder %s18, 0
      %p102 = por %p100, %p101
      %p103 = scmp.ne.s32.totalorder %s91, %s92
      %p104 = scmp.eq.s32.totalorder %s19, 1
      %p105 = por %p103, %p104
      %p107 = scmp.ne.s32.totalorder %s92, %s106
      %p108 = scmp.eq.s32.totalorder %s19, 0
      %p109 = por %p107, %p108
      %s110 = ssub.s32 %s13, %s20
      %p111 = scmp.eq.s32.totalorder %s110, 0
      %s113 = sadd.s32 %s112, 1
      %s114 = scalar_select %p111, %s112, %s113
      %p117 = pneg %p111
      %p118 = scmp.eq.s32.totalorder %s13, 1
      %p119 = por %p117, %p118
      %p120 = scmp.ne.s32.totalorder %s112, %s115
      %p121 = scmp.eq.s32.totalorder %s13, 0
      %p122 = por %p120, %p121
      %p123 = scmp.ne.s32.totalorder %s112, %s115
      %p124 = scmp.eq.s32.totalorder %s18, 1
      %p125 = por %p123, %p124
      %p126 = scmp.ne.s32.totalorder %s115, %s116
      %p127 = scmp.eq.s32.totalorder %s18, 0
      %p128 = por %p126, %p127
      %p129 = scmp.ne.s32.totalorder %s115, %s116
      %p130 = scmp.eq.s32.totalorder %s19, 1
      %p131 = por %p129, %p130
      %p133 = scmp.ne.s32.totalorder %s116, %s132
      %p134 = scmp.eq.s32.totalorder %s19, 0
      %p135 = por %p133, %p134
      %p136 = scmp.le.s32.totalorder 1, %s13
      %p137 = scmp.lt.s32.totalorder %s13, 3
      %p138 = pnand %p136, %p137
      %p139 = pneg %p138
      // Predicated region
      $region9: #{point_cn.1} parent=5 // pred_check
        _
      $region10: #{point_cn.1} parent=5 // pred_check_branch
        %141 = sbr.rel (%p138) target = $region12
      $region11: #{point_cn.1} parent=5 // pred_region
        %s142 = ssub.s32 %s13, 1
        // Predicated region
        $region13: #{point_cn.1} parent=11 // pred_check
          %p143 = pneg %p60
        $region14: #{point_cn.1} parent=11 // pred_check_branch
          %145 = sbr.rel (%p143) target = $region16
        $region15: #{point_cn.1} parent=11 // pred_region
          _
        $region16: #{point_cn.1} parent=11 // pred_fallthru
          _
        // Predicated region
        $region17: #{point_cn.1} parent=11 // pred_check
          %p146 = pneg %p81
        $region18: #{point_cn.1} parent=11 // pred_check_branch
          %148 = sbr.rel (%p146) target = $region20
        $region19: #{point_cn.1} parent=11 // pred_region
          _
        $region20: #{point_cn.1} parent=11 // pred_fallthru
          _
        // Predicated region
        $region21: #{point_cn.1} parent=11 // pred_check
          %p149 = pneg %p102
        $region22: #{point_cn.1} parent=11 // pred_check_branch
          %151 = sbr.rel (%p149) target = $region24
        $region23: #{point_cn.1} parent=11 // pred_region
          _
        $region24: #{point_cn.1} parent=11 // pred_fallthru
          _
      $region12: #{point_cn.1} parent=5 // pred_fallthru
        _
      %p152 = scmp.lt.s32.totalorder %s13, 2
      // Predicated region
      $region25: #{point_cn.1} parent=5 // pred_check
        %p153 = pneg %p152
      $region26: #{point_cn.1} parent=5 // pred_check_branch
        %155 = sbr.rel (%p153) target = $region28
      $region27: #{point_cn.1} parent=5 // pred_region
        // Predicated region
        $region29: #{point_cn.1} parent=27 // pred_check
          %p156 = pneg %p33
        $region30: #{point_cn.1} parent=27 // pred_check_branch
          %158 = sbr.rel (%p156) target = $region32
        $region31: #{point_cn.1} parent=27 // pred_region
          %p159 = scmp.lt.s32.totalorder %s13, 1
          %s160 = scalar_select %p159, %s13, 1
          %s161 = smul.addr %s160, 8
          %s162 = smul.addr %s161, 8
          %s163 = scalar_lea.vmem %s0, %s162
        $region32: #{point_cn.1} parent=27 // pred_fallthru
          _
      $region28: #{point_cn.1} parent=5 // pred_fallthru
        _
      %p164 = scmp.le.s32.totalorder 1, %s13
      %p165 = scmp.lt.s32.totalorder %s13, 3
      %p166 = pnand %p164, %p165
      %p167 = pneg %p166
      // Predicated region
      $region33: #{point_cn.1} parent=5 // pred_check
        _
      $region34: #{point_cn.1} parent=5 // pred_check_branch
        %169 = sbr.rel (%p166) target = $region36
      $region35: #{point_cn.1} parent=5 // pred_region
        %s170 = ssub.s32 %s13, 1
        %p171 = scmp.lt.s32.totalorder %s18, 1
        %s172 = scalar_select %p171, %s18, 1
        %s173 = smul.addr %s172, 8
        %s174 = smul.addr %s173, 8
        %s175 = scalar_lea.vmem %s0, %s174
        %p176 = pneg %p39
        %p177 = pneg %p36
        %p178 = pneg %p60
        %p179 = pneg %p57
        %p180 = pneg %p81
        %p181 = pneg %p78
        %p182 = pneg %p102
        %p183 = pneg %p99
        %p184 = pneg %p128
        %p185 = pneg %p125
        %s186 = sand.u32 %s115, 1
        %s187 = scalar_lea.sflag [#allocation3], %s186
        %s188 = sand.u32 %s115, 1
        %s189 = smul.addr %s188, 64
        %s190 = scalar_lea.vmem [#allocation2], %s189
        %p191 = scmp.lt.s32.totalorder %s18, 1
        %s192 = scalar_select %p191, %s18, 1
        %s193 = smul.addr %s192, 8
        %s194 = smul.addr %s193, 8
        %s195 = scalar_lea.vmem %s0, %s194
        %v196 = vld [vmem:[%s195] sm:$0xff]
        %v197 = vld [vmem:[%s195 + $0x8] sm:$0xff]
        %v198 = vld [vmem:[%s195 + $0x10] sm:$0xff]
        %v199 = vld [vmem:[%s195 + $0x18] sm:$0xff]
        %v200 = vld [vmem:[%s195 + $0x20] sm:$0xff]
        %v201 = vld [vmem:[%s195 + $0x28] sm:$0xff]
        %v202 = vld [vmem:[%s195 + $0x30] sm:$0xff]
        %v203 = vld [vmem:[%s195 + $0x38] sm:$0xff]
        %v204 = vld [vmem:[%s3] sm:$0xff]
        %v205 = vld [vmem:[%s3 + $0x8] sm:$0xff]
        %v206 = vld [vmem:[%s3 + $0x10] sm:$0xff]
        %v207 = vld [vmem:[%s3 + $0x18] sm:$0xff]
        %v208 = vadd.f32 %v196, %v197
        %209 = vadd.xlane.f32.xlu0 %v208
        %v210 = vpop.xlane.xlu0 %209
        %v211 = vadd.f32 %v198, %v199
        %212 = vadd.xlane.f32.xlu0 %v211
        %v213 = vpop.xlane.xlu0 %212
        %v214 = vadd.f32 %v200, %v201
        %215 = vadd.xlane.f32.xlu0 %v214
        %v216 = vpop.xlane.xlu0 %215
        %v217 = vadd.f32 %v202, %v203
        %218 = vadd.xlane.f32.xlu0 %v217
        %v219 = vpop.xlane.xlu0 %218
        %v220 = vmul.f32 %v210, 0.00390625
        %v221 = vmul.f32 %v213, 0.00390625
        %v222 = vmul.f32 %v216, 0.00390625
        %v223 = vmul.f32 %v219, 0.00390625
        %v224 = vmul.f32 %v196, %v196
        %v225 = vmul.f32 %v197, %v197
        %v226 = vmul.f32 %v198, %v198
        %v227 = vmul.f32 %v199, %v199
        %v228 = vmul.f32 %v200, %v200
        %v229 = vmul.f32 %v201, %v201
        %v230 = vmul.f32 %v202, %v202
        %v231 = vmul.f32 %v203, %v203
        %v232 = vadd.f32 %v224, %v225
        %233 = vadd.xlane.f32.xlu0 %v232
        %v234 = vpop.xlane.xlu0 %233
        %v235 = vadd.f32 %v226, %v227
        %236 = vadd.xlane.f32.xlu0 %v235
        %v237 = vpop.xlane.xlu0 %236
        %v238 = vadd.f32 %v228, %v229
        %239 = vadd.xlane.f32.xlu0 %v238
        %v240 = vpop.xlane.xlu0 %239
        %v241 = vadd.f32 %v230, %v231
        %242 = vadd.xlane.f32.xlu0 %v241
        %v243 = vpop.xlane.xlu0 %242
        %v244 = vmul.f32 %v234, 0.00390625
        %v245 = vmul.f32 %v237, 0.00390625
        %v246 = vmul.f32 %v240, 0.00390625
        %v247 = vmul.f32 %v243, 0.00390625
        %v248 = vmul.f32 %v220, %v220
        %v249 = vmul.f32 %v221, %v221
        %v250 = vmul.f32 %v222, %v222
        %v251 = vmul.f32 %v223, %v223
        %v252 = vsub.f32 %v244, %v248
        %v253 = vsub.f32 %v245, %v249
        %v254 = vsub.f32 %v246, %v250
        %v255 = vsub.f32 %v247, %v251
        %v256 = vmax.f32 %v252, 0.0
        %v257 = vmax.f32 %v253, 0.0
        %v258 = vmax.f32 %v254, 0.0
        %v259 = vmax.f32 %v255, 0.0
        %v260 = vsub.f32 %v196, %v220
        %v261 = vsub.f32 %v197, %v220
        %v262 = vsub.f32 %v198, %v221
        %v263 = vsub.f32 %v199, %v221
        %v264 = vsub.f32 %v200, %v222
        %v265 = vsub.f32 %v201, %v222
        %v266 = vsub.f32 %v202, %v223
        %v267 = vsub.f32 %v203, %v223
        %v268 = vadd.f32 %v256, 0.001
        %v269 = vadd.f32 %v257, 0.001
        %v270 = vadd.f32 %v258, 0.001
        %v271 = vadd.f32 %v259, 0.001
        %v272 = vrsqrt.pop %v268
        %v273 = vrsqrt.pop %v269
        %v274 = vrsqrt.pop %v270
        %v275 = vrsqrt.pop %v271
        %v276 = vmul.f32 %v260, %v272
        %v277 = vmul.f32 %v261, %v272
        %v278 = vmul.f32 %v262, %v273
        %v279 = vmul.f32 %v263, %v273
        %v280 = vmul.f32 %v264, %v274
        %v281 = vmul.f32 %v265, %v274
        %v282 = vmul.f32 %v266, %v275
        %v283 = vmul.f32 %v267, %v275
        %285 = vset.pattern.permute.xlu0 0
        %286 = vperm.xlu0 %285, %v204
        %v287 = vpop.permute.xlu0 %286
        %290 = vset.pattern.permute.xlu0 0
        %291 = vperm.xlu0 %290, %v205
        %v292 = vpop.permute.xlu0 %291
        %295 = vset.pattern.permute.xlu0 0
        %296 = vperm.xlu0 %295, %v206
        %v297 = vpop.permute.xlu0 %296
        %300 = vset.pattern.permute.xlu0 0
        %301 = vperm.xlu0 %300, %v207
        %v302 = vpop.permute.xlu0 %301
        %v304 = vadd.f32 %v276, %v287
        %v305 = vadd.f32 %v277, %v287
        %v306 = vadd.f32 %v278, %v292
        %v307 = vadd.f32 %v279, %v292
        %v308 = vadd.f32 %v280, %v297
        %v309 = vadd.f32 %v281, %v297
        %v310 = vadd.f32 %v282, %v302
        %v311 = vadd.f32 %v283, %v302
        %v312 = vmax.f32 %v304, 0.0
        %v313 = vmax.f32 %v305, 0.0
        %v314 = vmax.f32 %v306, 0.0
        %v315 = vmax.f32 %v307, 0.0
        %v316 = vmax.f32 %v308, 0.0
        %v317 = vmax.f32 %v309, 0.0
        %v318 = vmax.f32 %v310, 0.0
        %v319 = vmax.f32 %v311, 0.0
        %v320 = vld [vmem:[%s1] sm:$0xff]
        %v321 = vld [vmem:[%s1 + $0x8] sm:$0xff]
        %v322 = vld [vmem:[%s1 + $0x10] sm:$0xff]
        %v323 = vld [vmem:[%s1 + $0x18] sm:$0xff]
        %vm324 = vcmask 261120
        %v326 = vsel %vm324, %v320, 0
        %v329 = vsel %vm324, %v321, 0
        %v332 = vsel %vm324, %v322, 0
        %v335 = vsel %vm324, %v323, 0
        %337 = vmatprep.subr.mxu0 %v313
        %338 = vmatpush1.msra.mxu0 %v312
        %339 = vmatprep.subr.mxu0 %v315
        %340 = vmatpush1.msra.mxu0 %v314
        %341 = vmatprep.subr.mxu0 %v317
        %342 = vmatpush1.msra.mxu0 %v316
        %343 = vmatprep.subr.mxu0 %v319
        %344 = vmatpush1.msra.mxu0 %v318
        %345 = vmatprep.subr.mxu0 0.0
        %346 = vmatpush1.msra.mxu0 0.0
        %347 = vmatprep.subr.mxu0 0.0
        %348 = vmatpush1.msra.mxu0 0.0
        %349 = vmatprep.subr.mxu0 0.0
        %350 = vmatpush1.msra.mxu0 0.0
        %351 = vmatprep.subr.mxu0 0.0
        %352 = vmatpush1.msra.mxu0 0.0
        %353 = vmatprep.subr.mxu0 0.0
        %354 = vmatpush1.msra.mxu0 0.0
        %355 = vmatprep.subr.mxu0 0.0
        %356 = vmatpush1.msra.mxu0 0.0
        %357 = vmatprep.subr.mxu0 0.0
        %358 = vmatpush1.msra.mxu0 0.0
        %359 = vmatprep.subr.mxu0 0.0
        %360 = vmatpush1.msra.mxu0 0.0
        %361 = vmatprep.subr.mxu0 0.0
        %362 = vmatpush1.msra.mxu0 0.0
        %363 = vmatprep.subr.mxu0 0.0
        %364 = vmatpush1.msra.mxu0 0.0
        %365 = vmatprep.subr.mxu0 0.0
        %366 = vmatpush1.msra.mxu0 0.0
        %367 = vmatprep.subr.mxu0 0.0
        %368 = vmatpush1.msra.mxu0 0.0
        %369 = vmatprep.subr.mxu0 0.0
        %370 = vmatpush1.msra.mxu0 0.0
        %371 = vmatprep.subr.mxu0 0.0
        %372 = vmatpush1.msra.mxu0 0.0
        %373 = vmatprep.subr.mxu0 0.0
        %374 = vmatpush1.msra.mxu0 0.0
        %375 = vmatprep.subr.mxu0 0.0
        %376 = vmatpush1.msra.mxu0 0.0
        %377 = vmatprep.subr.mxu0 0.0
        %378 = vmatpush1.msra.mxu0 0.0
        %379 = vmatprep.subr.mxu0 0.0
        %380 = vmatpush1.msra.mxu0 0.0
        %381 = vmatprep.subr.mxu0 0.0
        %382 = vmatpush1.msra.mxu0 0.0
        %383 = vmatprep.subr.mxu0 0.0
        %384 = vmatpush1.msra.mxu0 0.0
        %385 = vmatprep.subr.mxu0 0.0
        %386 = vmatpush1.msra.mxu0 0.0
        %387 = vmatprep.subr.mxu0 0.0
        %388 = vmatpush1.msra.mxu0 0.0
        %389 = vmatprep.subr.mxu0 0.0
        %390 = vmatpush1.msra.mxu0 0.0
        %391 = vmatprep.subr.mxu0 0.0
        %392 = vmatpush1.msra.mxu0 0.0
        %393 = vmatprep.subr.mxu0 0.0
        %394 = vmatpush1.msra.mxu0 0.0
        %395 = vmatprep.subr.mxu0 0.0
        %396 = vmatpush1.msra.mxu0 0.0
        %397 = vmatprep.subr.mxu0 0.0
        %398 = vmatpush1.msra.mxu0 0.0
        %399 = vmatprep.subr.mxu0 0.0
        %400 = vmatpush1.msra.mxu0 0.0
        %401 = vmatprep.mubr.f32.mxu0 0.0
        %402 = vmatmul.mubr.f32.gmra.mrb[0].mxu0 %v326
        %v403 = vpop.f32.mrb[0].mxu0
        %v404 = vadd.f32 0.0, %v403
        %v405 = vpop.f32.mrb[0].mxu0
        %v406 = vadd.f32 0.0, %v405
        %407 = vmatprep.mubr.f32.mxu0 0.0
        %408 = vmatmul.mubr.f32.gmra.mrb[0].mxu0 %v329
        %v409 = vpop.f32.mrb[0].mxu0
        %v410 = vadd.f32 0.0, %v409
        %v411 = vpop.f32.mrb[0].mxu0
        %v412 = vadd.f32 0.0, %v411
        %413 = vmatprep.mubr.f32.mxu0 0.0
        %414 = vmatmul.mubr.f32.gmra.mrb[0].mxu0 %v332
        %v415 = vpop.f32.mrb[0].mxu0
        %v416 = vadd.f32 0.0, %v415
        %v417 = vpop.f32.mrb[0].mxu0
        %v418 = vadd.f32 0.0, %v417
        %419 = vmatprep.mubr.f32.mxu0 0.0
        %420 = vmatmul.mubr.f32.gmra.mrb[0].mxu0 %v335
        %v421 = vpop.f32.mrb[0].mxu0
        %v422 = vadd.f32 0.0, %v421
        %v423 = vpop.f32.mrb[0].mxu0
        %v424 = vadd.f32 0.0, %v423
        %425 = vdwg.mxu0
        %v426 = vadd.f32 %v404, %v406
        %427 = vadd.xlane.f32.xlu0 %v426
        %v428 = vpop.xlane.xlu0 %427
        %v429 = vadd.f32 %v410, %v412
        %430 = vadd.xlane.f32.xlu0 %v429
        %v431 = vpop.xlane.xlu0 %430
        %v432 = vadd.f32 %v416, %v418
        %433 = vadd.xlane.f32.xlu0 %v432
        %v434 = vpop.xlane.xlu0 %433
        %v435 = vadd.f32 %v422, %v424
        %436 = vadd.xlane.f32.xlu0 %v435
        %v437 = vpop.xlane.xlu0 %436
        %v438 = vmul.f32 %v428, 0.00390625
        %v439 = vmul.f32 %v431, 0.00390625
        %v440 = vmul.f32 %v434, 0.00390625
        %v441 = vmul.f32 %v437, 0.00390625
        %v442 = vmul.f32 %v404, %v404
        %v443 = vmul.f32 %v406, %v406
        %v444 = vmul.f32 %v410, %v410
        %v445 = vmul.f32 %v412, %v412
        %v446 = vmul.f32 %v416, %v416
        %v447 = vmul.f32 %v418, %v418
        %v448 = vmul.f32 %v422, %v422
        %v449 = vmul.f32 %v424, %v424
        %v450 = vadd.f32 %v442, %v443
        %451 = vadd.xlane.f32.xlu0 %v450
        %v452 = vpop.xlane.xlu0 %451
        %v453 = vadd.f32 %v444, %v445
        %454 = vadd.xlane.f32.xlu0 %v453
        %v455 = vpop.xlane.xlu0 %454
        %v456 = vadd.f32 %v446, %v447
        %457 = vadd.xlane.f32.xlu0 %v456
        %v458 = vpop.xlane.xlu0 %457
        %v459 = vadd.f32 %v448, %v449
        %460 = vadd.xlane.f32.xlu0 %v459
        %v461 = vpop.xlane.xlu0 %460
        %v462 = vmul.f32 %v452, 0.00390625
        %v463 = vmul.f32 %v455, 0.00390625
        %v464 = vmul.f32 %v458, 0.00390625
        %v465 = vmul.f32 %v461, 0.00390625
        %v466 = vmul.f32 %v438, %v438
        %v467 = vmul.f32 %v439, %v439
        %v468 = vmul.f32 %v440, %v440
        %v469 = vmul.f32 %v441, %v441
        %v470 = vsub.f32 %v462, %v466
        %v471 = vsub.f32 %v463, %v467
        %v472 = vsub.f32 %v464, %v468
        %v473 = vsub.f32 %v465, %v469
        %v474 = vmax.f32 %v470, 0.0
        %v475 = vmax.f32 %v471, 0.0
        %v476 = vmax.f32 %v472, 0.0
        %v477 = vmax.f32 %v473, 0.0
        %v478 = vsub.f32 %v404, %v438
        %v479 = vsub.f32 %v406, %v438
        %v480 = vsub.f32 %v410, %v439
        %v481 = vsub.f32 %v412, %v439
        %v482 = vsub.f32 %v416, %v440
        %v483 = vsub.f32 %v418, %v440
        %v484 = vsub.f32 %v422, %v441
        %v485 = vsub.f32 %v424, %v441
        %v486 = vadd.f32 %v474, 0.001
        %v487 = vadd.f32 %v475, 0.001
        %v488 = vadd.f32 %v476, 0.001
        %v489 = vadd.f32 %v477, 0.001
        %v490 = vrsqrt.pop %v486
        %v491 = vrsqrt.pop %v487
        %v492 = vrsqrt.pop %v488
        %v493 = vrsqrt.pop %v489
        %v494 = vmul.f32 %v478, %v490
        %v495 = vmul.f32 %v479, %v490
        %v496 = vmul.f32 %v480, %v491
        %v497 = vmul.f32 %v481, %v491
        %v498 = vmul.f32 %v482, %v492
        %v499 = vmul.f32 %v483, %v492
        %v500 = vmul.f32 %v484, %v493
        %v501 = vmul.f32 %v485, %v493
        %502 = vset.pattern.permute.xlu0 1
        %503 = vperm.xlu0 %502, %v204
        %v504 = vpop.permute.xlu0 %503
        %506 = vset.pattern.permute.xlu0 1
        %507 = vperm.xlu0 %506, %v205
        %v508 = vpop.permute.xlu0 %507
        %510 = vset.pattern.permute.xlu0 1
        %511 = vperm.xlu0 %510, %v206
        %v512 = vpop.permute.xlu0 %511
        %514 = vset.pattern.permute.xlu0 1
        %515 = vperm.xlu0 %514, %v207
        %v516 = vpop.permute.xlu0 %515
        %v518 = vadd.f32 %v494, %v504
        %v519 = vadd.f32 %v495, %v504
        %v520 = vadd.f32 %v496, %v508
        %v521 = vadd.f32 %v497, %v508
        %v522 = vadd.f32 %v498, %v512
        %v523 = vadd.f32 %v499, %v512
        %v524 = vadd.f32 %v500, %v516
        %v525 = vadd.f32 %v501, %v516
        %v526 = vmax.f32 %v518, 0.0
        %v527 = vmax.f32 %v519, 0.0
        %v528 = vmax.f32 %v520, 0.0
        %v529 = vmax.f32 %v521, 0.0
        %v530 = vmax.f32 %v522, 0.0
        %v531 = vmax.f32 %v523, 0.0
        %v532 = vmax.f32 %v524, 0.0
        %v533 = vmax.f32 %v525, 0.0
        %v534 = vld [vmem:[%s2] sm:$0xff]
        %v535 = vld [vmem:[%s2 + $0x8] sm:$0xff]
        %v536 = vld [vmem:[%s2 + $0x10] sm:$0xff]
        %v537 = vld [vmem:[%s2 + $0x18] sm:$0xff]
        %v539 = vsel %vm324, %v534, 0
        %v542 = vsel %vm324, %v535, 0
        %v545 = vsel %vm324, %v536, 0
        %v548 = vsel %vm324, %v537, 0
        %550 = vmatprep.subr.mxu0 %v527
        %551 = vmatpush1.msra.mxu0 %v526
        %552 = vmatprep.subr.mxu0 %v529
        %553 = vmatpush1.msra.mxu0 %v528
        %554 = vmatprep.subr.mxu0 %v531
        %555 = vmatpush1.msra.mxu0 %v530
        %556 = vmatprep.subr.mxu0 %v533
        %557 = vmatpush1.msra.mxu0 %v532
        %558 = vmatprep.subr.mxu0 0.0
        %559 = vmatpush1.msra.mxu0 0.0
        %560 = vmatprep.subr.mxu0 0.0
        %561 = vmatpush1.msra.mxu0 0.0
        %562 = vmatprep.subr.mxu0 0.0
        %563 = vmatpush1.msra.mxu0 0.0
        %564 = vmatprep.subr.mxu0 0.0
        %565 = vmatpush1.msra.mxu0 0.0
        %566 = vmatprep.subr.mxu0 0.0
        %567 = vmatpush1.msra.mxu0 0.0
        %568 = vmatprep.subr.mxu0 0.0
        %569 = vmatpush1.msra.mxu0 0.0
        %570 = vmatprep.subr.mxu0 0.0
        %571 = vmatpush1.msra.mxu0 0.0
        %572 = vmatprep.subr.mxu0 0.0
        %573 = vmatpush1.msra.mxu0 0.0
        %574 = vmatprep.subr.mxu0 0.0
        %575 = vmatpush1.msra.mxu0 0.0
        %576 = vmatprep.subr.mxu0 0.0
        %577 = vmatpush1.msra.mxu0 0.0
        %578 = vmatprep.subr.mxu0 0.0
        %579 = vmatpush1.msra.mxu0 0.0
        %580 = vmatprep.subr.mxu0 0.0
        %581 = vmatpush1.msra.mxu0 0.0
        %582 = vmatprep.subr.mxu0 0.0
        %583 = vmatpush1.msra.mxu0 0.0
        %584 = vmatprep.subr.mxu0 0.0
        %585 = vmatpush1.msra.mxu0 0.0
        %586 = vmatprep.subr.mxu0 0.0
        %587 = vmatpush1.msra.mxu0 0.0
        %588 = vmatprep.subr.mxu0 0.0
        %589 = vmatpush1.msra.mxu0 0.0
        %590 = vmatprep.subr.mxu0 0.0
        %591 = vmatpush1.msra.mxu0 0.0
        %592 = vmatprep.subr.mxu0 0.0
        %593 = vmatpush1.msra.mxu0 0.0
        %594 = vmatprep.subr.mxu0 0.0
        %595 = vmatpush1.msra.mxu0 0.0
        %596 = vmatprep.subr.mxu0 0.0
        %597 = vmatpush1.msra.mxu0 0.0
        %598 = vmatprep.subr.mxu0 0.0
        %599 = vmatpush1.msra.mxu0 0.0
        %600 = vmatprep.subr.mxu0 0.0
        %601 = vmatpush1.msra.mxu0 0.0
        %602 = vmatprep.subr.mxu0 0.0
        %603 = vmatpush1.msra.mxu0 0.0
        %604 = vmatprep.subr.mxu0 0.0
        %605 = vmatpush1.msra.mxu0 0.0
        %606 = vmatprep.subr.mxu0 0.0
        %607 = vmatpush1.msra.mxu0 0.0
        %608 = vmatprep.subr.mxu0 0.0
        %609 = vmatpush1.msra.mxu0 0.0
        %610 = vmatprep.subr.mxu0 0.0
        %611 = vmatpush1.msra.mxu0 0.0
        %612 = vmatprep.subr.mxu0 0.0
        %613 = vmatpush1.msra.mxu0 0.0
        %614 = vmatprep.mubr.f32.mxu0 0.0
        %615 = vmatmul.mubr.f32.gmra.mrb[0].mxu0 %v539
        %v616 = vpop.f32.mrb[0].mxu0
        %v617 = vadd.f32 %v196, %v616
        %v618 = vpop.f32.mrb[0].mxu0
        %v619 = vadd.f32 %v197, %v618
        %620 = vmatprep.mubr.f32.mxu0 0.0
        %621 = vmatmul.mubr.f32.gmra.mrb[0].mxu0 %v542
        %v622 = vpop.f32.mrb[0].mxu0
        %v623 = vadd.f32 %v198, %v622
        %v624 = vpop.f32.mrb[0].mxu0
        %v625 = vadd.f32 %v199, %v624
        %626 = vmatprep.mubr.f32.mxu0 0.0
        %627 = vmatmul.mubr.f32.gmra.mrb[0].mxu0 %v545
        %v628 = vpop.f32.mrb[0].mxu0
        %v629 = vadd.f32 %v200, %v628
        %v630 = vpop.f32.mrb[0].mxu0
        %v631 = vadd.f32 %v201, %v630
        %632 = vmatprep.mubr.f32.mxu0 0.0
        %633 = vmatmul.mubr.f32.gmra.mrb[0].mxu0 %v548
        %v634 = vpop.f32.mrb[0].mxu0
        %v635 = vadd.f32 %v202, %v634
        %v636 = vpop.f32.mrb[0].mxu0
        %v637 = vadd.f32 %v203, %v636
        %638 = vdwg.mxu0
        %639 = vset.pattern.permute.xlu0 2
        %640 = vperm.xlu0 %639, %v204
        %v641 = vpop.permute.xlu0 %640
        %643 = vset.pattern.permute.xlu0 2
        %644 = vperm.xlu0 %643, %v205
        %v645 = vpop.permute.xlu0 %644
        %647 = vset.pattern.permute.xlu0 2
        %648 = vperm.xlu0 %647, %v206
        %v649 = vpop.permute.xlu0 %648
        %651 = vset.pattern.permute.xlu0 2
        %652 = vperm.xlu0 %651, %v207
        %v653 = vpop.permute.xlu0 %652
        %v655 = vadd.f32 %v617, %v641
        %v656 = vadd.f32 %v619, %v641
        %v657 = vadd.f32 %v623, %v645
        %v658 = vadd.f32 %v625, %v645
        %v659 = vadd.f32 %v629, %v649
        %v660 = vadd.f32 %v631, %v649
        %v661 = vadd.f32 %v635, %v653
        %v662 = vadd.f32 %v637, %v653
        %663 = vst [vmem:[%s190] sm:$0xff] %v655
        %664 = vst [vmem:[%s190 + $0x8] sm:$0xff] %v656
        %665 = vst [vmem:[%s190 + $0x10] sm:$0xff] %v657
        %666 = vst [vmem:[%s190 + $0x18] sm:$0xff] %v658
        %667 = vst [vmem:[%s190 + $0x20] sm:$0xff] %v659
        %668 = vst [vmem:[%s190 + $0x28] sm:$0xff] %v660
        %669 = vst [vmem:[%s190 + $0x30] sm:$0xff] %v661
        %670 = vst [vmem:[%s190 + $0x38] sm:$0xff] %v662
        %s671 = sand.u32 %s115, 1
        %s672 = scalar_lea.sflag [#allocation3], %s671
        %s673 = sand.u32 %s115, 1
        %s674 = smul.addr %s673, 64
        %s675 = scalar_lea.vmem [#allocation2], %s674
        // Predicated region
        $region37: #{point_cn.1} parent=35 // pred_check
          %p676 = pneg %p125
        $region38: #{point_cn.1} parent=35 // pred_check_branch
          %678 = sbr.rel (%p676) target = $region40
        $region39: #{point_cn.1} parent=35 // pred_region
          %s680 = ssub.s32 1024, 1024
          %681 = vsyncadd %s672, %s680
          %s682 = smul.addr %s18, 8
          %s683 = smul.addr %s682, 128
          %s684 = scalar_lea.hbm %s4, %s683
          %s685 = sshll.u32 %s675, 4
          %s686 = int_to_ptr.vmem [resolvable:$true] %s685
          %691 = dma.vmem_to_hbm [thread:$0]  %s686, 1024, %s684, %s672, 256, 256, 16
        $region40: #{point_cn.1} parent=35 // pred_fallthru
          _
      $region36: #{point_cn.1} parent=5 // pred_fallthru
        _
      %p692 = scmp.le.s32.totalorder 2, %s13
      // Predicated region
      $region41: #{point_cn.1} parent=5 // pred_check
        %p693 = pneg %p692
      $region42: #{point_cn.1} parent=5 // pred_check_branch
        %695 = sbr.rel (%p693) target = $region44
      $region43: #{point_cn.1} parent=5 // pred_region
        %s696 = ssub.s32 %s13, 2
        // Predicated region
        $region45: #{point_cn.1} parent=43 // pred_check
          %p697 = pneg %p131
        $region46: #{point_cn.1} parent=43 // pred_check_branch
          %699 = sbr.rel (%p697) target = $region48
        $region47: #{point_cn.1} parent=43 // pred_region
          %s700 = sand.u32 %s116, 1
          %s701 = scalar_lea.sflag [#allocation3], %s700
          %s702 = sand.u32 %s116, 1
          %s703 = smul.addr %s702, 64
          %s704 = scalar_lea.vmem [#allocation2], %s703
          %705 = dma.done %s701, 1024
        $region48: #{point_cn.1} parent=43 // pred_fallthru
          _
      $region44: #{point_cn.1} parent=5 // pred_fallthru
        _
    $region6: #{point_cn.1} parent=1 // loop_footer
      %s17 = sadd.s32 1, %s13
    $region7: #{point_cn.1} parent=1 // loop_footer_branch
      %12 = sbr.rel target = $region3
    $region8: #{point_cn.1} parent=1 // loop_exit
      _
    %706 = vsyncpa [#allocation3], 1
    %s707 = scalar_lea.sflag [#allocation3], 1
    %708 = vsyncpa %s707, 1

</llo_original>
